<compile_context>
chip_gen: v7x
topology: tpu7x:2x2x1
jax: 0.10.0
libtpu: 0.0.40
codegen_flags: <defaults>
</compile_context>

<pallas_src>
import functools

import jax
import jax.numpy as jnp
from jax.experimental import pallas as pl
from jax.experimental.pallas import tpu as pltpu


def _round_up(n, m):
    return ((n + m - 1) // m) * m


def _gating_kernel(x_ref, w_ref, b_ref, vals_ref, idx_ref, scores_ref, *, top_k, out_w):
    # ---- linear: logits = x @ W_t + b  (MXU, native-dtype operands) ----
    x = x_ref[...]                                    # (tm, D)
    w = w_ref[...]                                    # (D, E_pad), pre-transposed
    logits = jnp.dot(x, w, preferred_element_type=jnp.float32) + b_ref[...]  # (tm, E_pad)
    # padded expert columns carry bias = -inf -> logits = -inf -> score = 0

    # ---- softmax over experts (f32; reciprocal on the EUP slot) ----
    m = jnp.max(logits, axis=-1, keepdims=True)
    e = jnp.exp(logits - m)
    denom = jnp.sum(e, axis=-1, keepdims=True)
    scores = e * pl.reciprocal(denom, approx=False)   # (tm, E_pad)
    scores_ref[...] = scores

    # ---- top-k via iterative masked argmax (k tiny, fully unrolled) ----
    tm_rows, e_pad = scores.shape
    col_ids = jax.lax.broadcasted_iota(jnp.int32, scores.shape, 1)
    out_ids = jax.lax.broadcasted_iota(jnp.int32, (tm_rows, out_w), 1)

    work = scores
    vals_out = jnp.zeros((tm_rows, out_w), jnp.float32)
    idx_out = jnp.zeros((tm_rows, out_w), jnp.int32)
    for j in range(top_k):
        v = jnp.max(work, axis=-1, keepdims=True)                          # (tm, 1)
        is_max = work >= v
        # first (lowest) index achieving the max -> matches jax.lax.top_k tie order
        idx = jnp.min(jnp.where(is_max, col_ids, e_pad), axis=-1, keepdims=True)
        # assemble lane-dense outputs via broadcast + select (no narrow concats)
        vals_out = jnp.where(out_ids == j, v, vals_out)
        idx_out = jnp.where(out_ids == j, idx, idx_out)
        work = jnp.where(col_ids == idx, -jnp.inf, work)

    vals_ref[...] = vals_out
    idx_ref[...] = idx_out


def topk_gating(x, w, b, *, top_k=2, tm=512):
    """x: (..., D); w: (E, D) torch nn.Linear weight layout; b: (E,).

    Returns (topk_vals (..., K) f32, topk_idx (..., K) i32, scores (..., E) f32).
    """
    *lead, D = x.shape
    E = w.shape[0]
    assert top_k <= E, "top_k must be <= num_experts"

    x2 = x.reshape(-1, D)
    T = x2.shape[0]

    OUT_W = 128                              # lane-dense width for vals/idx outputs
    E_pad = _round_up(max(E, 128), 128)      # lane-pad experts
    tm = max(8, _round_up(min(tm, T), 8))    # token tile: big, multiple of 8

    # shrink tile if the double-buffered working set would blow VMEM (v7x: 64 MiB)
    def _est(tile):
        bytes_in = tile * D * x2.dtype.itemsize + D * E_pad * x2.dtype.itemsize + E_pad * 4
        bytes_out = tile * (E_pad + 2 * OUT_W) * 4
        return 2 * (bytes_in + bytes_out)    # double-buffered tiles
    while tm > 8 and _est(tm) > 48 * 1024 * 1024:
        tm //= 2
        tm = max(8, _round_up(tm, 8))

    T_pad = _round_up(T, tm)

    # ---- wrapper-side layout plumbing (done once, outside the kernel) ----
    x_p = x2 if T_pad == T else jnp.pad(x2, ((0, T_pad - T), (0, 0)))
    # gate weight pre-transposed to (D, E_pad); padded expert columns are 0
    w_t = jnp.zeros((D, E_pad), w.dtype).at[:, :E].set(w.T)
    # bias: padded experts get -inf so softmax/top-k ignore them
    b_p = jnp.full((1, E_pad), -jnp.inf, dtype=jnp.float32)
    b_p = b_p.at[:, :E].set(b.reshape(1, E).astype(jnp.float32))

    vmem_limit = int(min(max(32 * 1024 * 1024, 2 * _est(tm)), 64 * 1024 * 1024))

    kernel = functools.partial(_gating_kernel, top_k=top_k, out_w=OUT_W)
    vals_p, idx_p, scores_p = pl.pallas_call(
        kernel,
        out_shape=(
            jax.ShapeDtypeStruct((T_pad, OUT_W), jnp.float32),
            jax.ShapeDtypeStruct((T_pad, OUT_W), jnp.int32),
            jax.ShapeDtypeStruct((T_pad, E_pad), jnp.float32),
        ),
        grid_spec=pltpu.PrefetchScalarGridSpec(
            num_scalar_prefetch=0,
            grid=(T_pad // tm,),
            in_specs=[
                pl.BlockSpec((tm, D), lambda i: (i, 0)),      # token tile of x
                pl.BlockSpec((D, E_pad), lambda i: (0, 0)),   # pre-transposed gate weight
                pl.BlockSpec((1, E_pad), lambda i: (0, 0)),   # bias (with -inf pads)
            ],
            out_specs=[
                pl.BlockSpec((tm, OUT_W), lambda i: (i, 0)),
                pl.BlockSpec((tm, OUT_W), lambda i: (i, 0)),
                pl.BlockSpec((tm, E_pad), lambda i: (i, 0)),
            ],
        ),
        compiler_params=pltpu.CompilerParams(
            dimension_semantics=("parallel",),
            vmem_limit_bytes=vmem_limit,
        ),
    )(x_p, w_t, b_p)

    # slice back to the logical shapes / restore leading dims
    vals = vals_p[:T, :top_k].reshape(*lead, top_k)
    idx = idx_p[:T, :top_k].reshape(*lead, top_k)
    scores = scores_p[:T, :E].reshape(*lead, E)
    return vals, idx, scores


def _check(T, D, E, K, key):
    kx, kw, kb = jax.random.split(key, 3)
    x = jax.random.normal(kx, (T, D), dtype=jnp.float32)
    w = jax.random.normal(kw, (E, D), dtype=jnp.float32) * 0.1
    b = jax.random.normal(kb, (E,), dtype=jnp.float32) * 0.1

    vals, idx, scores = topk_gating(x, w, b, top_k=K)
    jax.block_until_ready((vals, idx, scores))

    # pure-JAX reference
    ref_logits = x @ w.T + b
    ref_scores = jax.nn.softmax(ref_logits, axis=-1)
    ref_vals, ref_idx = jax.lax.top_k(ref_scores, K)
    assert jnp.allclose(scores, ref_scores, atol=1e-5), "scores mismatch"
    assert jnp.allclose(vals, ref_vals, atol=1e-5), "topk values mismatch"
    assert jnp.array_equal(idx, ref_idx.astype(jnp.int32)), "topk indices mismatch"


if __name__ == "__main__":
    root = jax.random.PRNGKey(0)
    k0, k1 = jax.random.split(root, 2)
    # small shapes consistent with the module: (tokens, input_dim, experts, k)
    _check(T=8, D=32, E=8, K=2, key=k0)
    # exercises token padding (T not multiple of 8) and expert lane-padding
    _check(T=20, D=48, E=6, K=3, key=k1)
    print("KERNEL_OK")
</pallas_src>

<mosaic_0001>
module attributes {stable_mosaic.version = 11 : i64} {
  func.func @_gating_kernel(%arg0: i32, %arg1: memref<8x32xf32, #tpu.memory_space<vmem>>, %arg2: memref<32x128xf32, #tpu.memory_space<vmem>>, %arg3: memref<1x128xf32, #tpu.memory_space<vmem>>, %arg4: memref<8x128xf32, #tpu.memory_space<vmem>>, %arg5: memref<8x128xi32, #tpu.memory_space<vmem>>, %arg6: memref<8x128xf32, #tpu.memory_space<vmem>>) attributes {dimension_semantics = [#tpu.dimension_semantics<parallel>], iteration_bounds = array<i64: 1>, scalar_prefetch = 0 : i64, scratch_operands = 0 : i64, tpu.core_type = #tpu.core_type<tc>, window_params = [{transform_indices = @transform_0, window_bounds = array<i64: 8, 32>}, {pipeline_mode = #tpu.pipeline_mode<synchronous>, transform_indices = @transform_1, window_bounds = array<i64: 32, 128>}, {pipeline_mode = #tpu.pipeline_mode<synchronous>, transform_indices = @transform_2, window_bounds = array<i64: 1, 128>}, {transform_indices = @transform_3, window_bounds = array<i64: 8, 128>}, {transform_indices = @transform_4, window_bounds = array<i64: 8, 128>}, {transform_indices = @transform_5, window_bounds = array<i64: 8, 128>}]} {
    %c0 = arith.constant 0 : index
    %c0_0 = arith.constant 0 : index
    %0 = vector.load %arg1[%c0, %c0_0] : memref<8x32xf32, #tpu.memory_space<vmem>>, vector<8x32xf32>
    %c0_1 = arith.constant 0 : index
    %c0_2 = arith.constant 0 : index
    %1 = vector.load %arg2[%c0_1, %c0_2] : memref<32x128xf32, #tpu.memory_space<vmem>>, vector<32x128xf32>
    %cst = arith.constant dense<0.000000e+00> : vector<8x128xf32>
    %2 = tpu.matmul %0, %1, %cst {dimension_numbers = #tpu.dot_dimension_numbers<[1], [0], [0], [1], [0, 0, 1, 1], [], []>} : vector<8x32xf32>, vector<32x128xf32>, vector<8x128xf32> -> vector<8x128xf32>
    %c0_3 = arith.constant 0 : index
    %c0_4 = arith.constant 0 : index
    %3 = vector.load %arg3[%c0_3, %c0_4] : memref<1x128xf32, #tpu.memory_space<vmem>>, vector<1x128xf32>
    %4 = vector.broadcast %3 : vector<1x128xf32> to vector<8x128xf32>
    %5 = arith.addf %2, %4 : vector<8x128xf32>
    %cst_5 = arith.constant dense<0xFF800000> : vector<8xf32>
    %6 = vector.multi_reduction <maximumf>, %5, %cst_5 [1] : vector<8x128xf32> to vector<8xf32>
    %7 = vector.shape_cast %6 : vector<8xf32> to vector<8x1xf32>
    %8 = vector.broadcast %7 : vector<8x1xf32> to vector<8x128xf32>
    %9 = arith.subf %5, %8 : vector<8x128xf32>
    %10 = math.exp %9 : vector<8x128xf32>
    %cst_6 = arith.constant dense<0.000000e+00> : vector<8xf32>
    %11 = vector.multi_reduction <add>, %10, %cst_6 [1] : vector<8x128xf32> to vector<8xf32>
    %12 = vector.shape_cast %11 : vector<8xf32> to vector<8x1xf32>
    %13 = tpu.reciprocal %12 : vector<8x1xf32> -> vector<8x1xf32>
    %14 = vector.broadcast %13 : vector<8x1xf32> to vector<8x128xf32>
    %15 = arith.mulf %10, %14 : vector<8x128xf32>
    %c0_7 = arith.constant 0 : index
    %c0_8 = arith.constant 0 : index
    %16 = vector.load %arg6[%c0_7, %c0_8] : memref<8x128xf32, #tpu.memory_space<vmem>>, vector<8x128xf32>
    tpu.vector_store %arg6[%c0_7, %c0_8], %15 {strides = array<i32>} : memref<8x128xf32, #tpu.memory_space<vmem>>, vector<8x128xf32>,
    %17 = tpu.iota {dimensions = array<i32: 1>} : vector<8x128xi32>
    %18 = tpu.iota {dimensions = array<i32: 1>} : vector<8x128xi32>
    %cst_9 = arith.constant 0.000000e+00 : f32
    %19 = vector.broadcast %cst_9 : f32 to vector<8x128xf32>
    %c0_i32 = arith.constant 0 : i32
    %20 = vector.broadcast %c0_i32 : i32 to vector<8x128xi32>
    %cst_10 = arith.constant dense<0xFF800000> : vector<8xf32>
    %21 = vector.multi_reduction <maximumf>, %15, %cst_10 [1] : vector<8x128xf32> to vector<8xf32>
    %22 = vector.shape_cast %21 : vector<8xf32> to vector<8x1xf32>
    %23 = vector.broadcast %22 : vector<8x1xf32> to vector<8x128xf32>
    %24 = arith.cmpf oge, %15, %23 : vector<8x128xf32>
    %c128_i32 = arith.constant 128 : i32
    %25 = vector.broadcast %c128_i32 : i32 to vector<8x128xi32>
    %26 = arith.select %24, %17, %25 : vector<8x128xi1>, vector<8x128xi32>
    %cst_11 = arith.constant dense<2147483647> : vector<8xi32>
    %27 = vector.multi_reduction <minsi>, %26, %cst_11 [1] : vector<8x128xi32> to vector<8xi32>
    %28 = vector.shape_cast %27 : vector<8xi32> to vector<8x1xi32>
    %c0_i32_12 = arith.constant 0 : i32
    %29 = vector.broadcast %c0_i32_12 : i32 to vector<8x128xi32>
    %30 = arith.cmpi eq, %18, %29 : vector<8x128xi32>
    %31 = vector.shape_cast %22 : vector<8x1xf32> to vector<8x1xf32>
    %32 = vector.broadcast %31 : vector<8x1xf32> to vector<8x128xf32>
    %33 = arith.select %30, %32, %19 : vector<8x128xi1>, vector<8x128xf32>
    %c0_i32_13 = arith.constant 0 : i32
    %34 = vector.broadcast %c0_i32_13 : i32 to vector<8x128xi32>
    %35 = arith.cmpi eq, %18, %34 : vector<8x128xi32>
    %36 = vector.shape_cast %28 : vector<8x1xi32> to vector<8x1xi32>
    %37 = vector.broadcast %36 : vector<8x1xi32> to vector<8x128xi32>
    %38 = arith.select %35, %37, %20 : vector<8x128xi1>, vector<8x128xi32>
    %39 = vector.broadcast %28 : vector<8x1xi32> to vector<8x128xi32>
    %40 = arith.cmpi eq, %17, %39 : vector<8x128xi32>
    %cst_14 = arith.constant 0xFF800000 : f32
    %41 = vector.broadcast %cst_14 : f32 to vector<8x128xf32>
    %42 = arith.select %40, %41, %15 : vector<8x128xi1>, vector<8x128xf32>
    %cst_15 = arith.constant dense<0xFF800000> : vector<8xf32>
    %43 = vector.multi_reduction <maximumf>, %42, %cst_15 [1] : vector<8x128xf32> to vector<8xf32>
    %44 = vector.shape_cast %43 : vector<8xf32> to vector<8x1xf32>
    %45 = vector.broadcast %44 : vector<8x1xf32> to vector<8x128xf32>
    %46 = arith.cmpf oge, %42, %45 : vector<8x128xf32>
    %c128_i32_16 = arith.constant 128 : i32
    %47 = vector.broadcast %c128_i32_16 : i32 to vector<8x128xi32>
    %48 = arith.select %46, %17, %47 : vector<8x128xi1>, vector<8x128xi32>
    %cst_17 = arith.constant dense<2147483647> : vector<8xi32>
    %49 = vector.multi_reduction <minsi>, %48, %cst_17 [1] : vector<8x128xi32> to vector<8xi32>
    %50 = vector.shape_cast %49 : vector<8xi32> to vector<8x1xi32>
    %c1_i32 = arith.constant 1 : i32
    %51 = vector.broadcast %c1_i32 : i32 to vector<8x128xi32>
    %52 = arith.cmpi eq, %18, %51 : vector<8x128xi32>
    %53 = vector.shape_cast %44 : vector<8x1xf32> to vector<8x1xf32>
    %54 = vector.broadcast %53 : vector<8x1xf32> to vector<8x128xf32>
    %55 = arith.select %52, %54, %33 : vector<8x128xi1>, vector<8x128xf32>
    %c1_i32_18 = arith.constant 1 : i32
    %56 = vector.broadcast %c1_i32_18 : i32 to vector<8x128xi32>
    %57 = arith.cmpi eq, %18, %56 : vector<8x128xi32>
    %58 = vector.shape_cast %50 : vector<8x1xi32> to vector<8x1xi32>
    %59 = vector.broadcast %58 : vector<8x1xi32> to vector<8x128xi32>
    %60 = arith.select %57, %59, %38 : vector<8x128xi1>, vector<8x128xi32>
    %c0_19 = arith.constant 0 : index
    %c0_20 = arith.constant 0 : index
    %61 = vector.load %arg4[%c0_19, %c0_20] : memref<8x128xf32, #tpu.memory_space<vmem>>, vector<8x128xf32>
    tpu.vector_store %arg4[%c0_19, %c0_20], %55 {strides = array<i32>} : memref<8x128xf32, #tpu.memory_space<vmem>>, vector<8x128xf32>,
    %c0_21 = arith.constant 0 : index
    %c0_22 = arith.constant 0 : index
    %62 = vector.load %arg5[%c0_21, %c0_22] : memref<8x128xi32, #tpu.memory_space<vmem>>, vector<8x128xi32>
    tpu.vector_store %arg5[%c0_21, %c0_22], %60 {strides = array<i32>} : memref<8x128xi32, #tpu.memory_space<vmem>>, vector<8x128xi32>,
    return
  }
  func.func @transform_0(%arg0: i32) -> (i32, i32) {
    %c0_i32 = arith.constant 0 : i32
    %c0_i32_0 = arith.constant 0 : i32
    return %arg0, %c0_i32 : i32, i32
  }
  func.func @transform_1(%arg0: i32) -> (i32, i32) {
    %c0_i32 = arith.constant 0 : i32
    %c0_i32_0 = arith.constant 0 : i32
    %c0_i32_1 = arith.constant 0 : i32
    return %c0_i32, %c0_i32_0 : i32, i32
  }
  func.func @transform_2(%arg0: i32) -> (i32, i32) {
    %c0_i32 = arith.constant 0 : i32
    %c0_i32_0 = arith.constant 0 : i32
    %c0_i32_1 = arith.constant 0 : i32
    return %c0_i32, %c0_i32_0 : i32, i32
  }
  func.func @transform_3(%arg0: i32) -> (i32, i32) {
    %c0_i32 = arith.constant 0 : i32
    %c0_i32_0 = arith.constant 0 : i32
    return %arg0, %c0_i32 : i32, i32
  }
  func.func @transform_4(%arg0: i32) -> (i32, i32) {
    %c0_i32 = arith.constant 0 : i32
    %c0_i32_0 = arith.constant 0 : i32
    return %arg0, %c0_i32 : i32, i32
  }
  func.func @transform_5(%arg0: i32) -> (i32, i32) {
    %c0_i32 = arith.constant 0 : i32
    %c0_i32_0 = arith.constant 0 : i32
    return %arg0, %c0_i32 : i32, i32
  }
}

</mosaic_0001>

<llo_original>
// kernel: tpu_custom_call.1
$region0: #{tpu_custom_call.1}
  #allocation0 [shape = 'u32[]', space=smem, size = 0x4, offset = 0x4, fixed_abs, tag = 'smem constant byte address 0x4 - core index']
  #allocation1 [shape = 'u32[144,128]{1,0:T(1,128)}', space=vmem, size = 0x12000, scoped, tag = 'internal scratch']
  %s0 = inlined_call_operand.hbm [shape: f32[8,32], index: 0, kind: input, shape index: {}]
  %s1 = inlined_call_operand.hbm [shape: f32[32,128], index: 1, kind: input, shape index: {}]
  %s2 = inlined_call_operand.vmem [shape: f32[1,128], index: 2, kind: input, shape index: {}]
  %s3 = inlined_call_operand.hbm [shape: f32[8,128], index: 3, kind: output, shape index: {0}]
  %s4 = inlined_call_operand.hbm [shape: s32[8,128], index: 4, kind: output, shape index: {1}]
  %s5 = inlined_call_operand.hbm [shape: f32[8,128], index: 5, kind: output, shape index: {2}]
  %6 = xla_tuple %s3, %s4, %s5
  %s7 = sld [smem:[#allocation0]]
  $region46: #{tpu_custom_call.1} parent=0
    _
  %s9 = ssub.s32 1, %s7
  %s10 = scalar_select 0, %s9, %s7
  $region1: #{tpu_custom_call.1} parent=0
    #allocation2 [shape = 'u8[4096]{0}', space=vmem, size = 0x1000, scoped, tag = 'input window, operand 0, single buffered']
    #allocation3 [shape = 's32[1]{0}', space=sflag, size = 0x4, scoped, tag = 'scoped memory for tpu_custom_call.1']
    #allocation4 [shape = 's32[1]{0}', space=sflag, size = 0x4, scoped, tag = 'scoped memory for tpu_custom_call.1']
    #allocation5 [shape = 'u8[16384]{0}', space=vmem, size = 0x4000, scoped, tag = 'input window, operand 1, single buffered']
    #allocation6 [shape = 's32[1]{0}', space=sflag, size = 0x4, scoped, tag = 'scoped memory for tpu_custom_call.1']
    #allocation7 [shape = 'u8[4096]{0}', space=vmem, size = 0x1000, scoped, tag = 'output window, operand 0, single buffered']
    #allocation8 [shape = 'u8[4096]{0}', space=vmem, size = 0x1000, scoped, tag = 'output window, operand 1, single buffered']
    #allocation9 [shape = 's32[1]{0}', space=sflag, size = 0x4, scoped, tag = 'scoped memory for tpu_custom_call.1']
    #allocation10 [shape = 'u8[4096]{0}', space=vmem, size = 0x1000, scoped, tag = 'output window, operand 2, single buffered']
    %11 = vsyncpa [#allocation3], 0
    %12 = vsyncpa [#allocation6], 0
    %13 = vsyncpa [#allocation4], 0
    %14 = vsyncpa [#allocation9], 0
    // Predicated region
    $region2: #{tpu_custom_call.1} parent=1 // pred_check
      _
    $region3: #{tpu_custom_call.1} parent=1 // pred_check_branch
      %16 = sbr.rel (0) target = $region5
    $region4: #{tpu_custom_call.1} parent=1 // pred_region
      %s18 = ssub.s32 128, 128
      %19 = vsyncadd [#allocation3], %s18
      %s21 = sshll.u32 [#allocation2], 4
      %s22 = int_to_ptr.vmem [resolvable:$true] %s21
      %24 = dma.hbm_to_vmem [thread:$0]  %s0, 128, %s22, [#allocation3]
    $region5: #{tpu_custom_call.1} parent=1 // pred_fallthru
      _
    // Predicated region
    $region6: #{tpu_custom_call.1} parent=1 // pred_check
      _
    $region7: #{tpu_custom_call.1} parent=1 // pred_check_branch
      %26 = sbr.rel (0) target = $region9
    $region8: #{tpu_custom_call.1} parent=1 // pred_region
      %s28 = ssub.s32 512, 512
      %29 = vsyncadd [#allocation6], %s28
      %s30 = sshll.u32 [#allocation5], 4
      %s31 = int_to_ptr.vmem [resolvable:$true] %s30
      %36 = dma.hbm_to_vmem [thread:$0]  %s1, 512, %s31, [#allocation6], 128, 128, 8
    $region9: #{tpu_custom_call.1} parent=1 // pred_fallthru
      _
    // Predicated region
    $region10: #{tpu_custom_call.1} parent=1 // pred_check
      _
    $region11: #{tpu_custom_call.1} parent=1 // pred_check_branch
      %38 = sbr.rel (0) target = $region13
    $region12: #{tpu_custom_call.1} parent=1 // pred_region
      _
    $region13: #{tpu_custom_call.1} parent=1 // pred_fallthru
      _
    // Predicated region
    $region14: #{tpu_custom_call.1} parent=1 // pred_check
      _
    $region15: #{tpu_custom_call.1} parent=1 // pred_check_branch
      %40 = sbr.rel (0) target = $region17
    $region16: #{tpu_custom_call.1} parent=1 // pred_region
      %41 = dma.done [#allocation3], 128
    $region17: #{tpu_custom_call.1} parent=1 // pred_fallthru
      _
    // Predicated region
    $region18: #{tpu_custom_call.1} parent=1 // pred_check
      _
    $region19: #{tpu_custom_call.1} parent=1 // pred_check_branch
      %43 = sbr.rel (0) target = $region21
    $region20: #{tpu_custom_call.1} parent=1 // pred_region
      %44 = dma.done [#allocation6], 512
    $region21: #{tpu_custom_call.1} parent=1 // pred_fallthru
      _
    %v45 = vld [vmem:[#allocation2] sm:$0xff]
    %v46 = vld [vmem:[#allocation5] sm:$0xff]
    %v47 = vld [vmem:[#allocation5 + $0x8] sm:$0xff]
    %v48 = vld [vmem:[#allocation5 + $0x10] sm:$0xff]
    %v49 = vld [vmem:[#allocation5 + $0x18] sm:$0xff]
    %v50 = vld [vmem:[%s2] sm:$0x1]
    %v52 = vlaneseq
    %v53 = vshrl.u32 %v52, 7
    %v54 = vsub.s32 0, %v53
    %v55 = vrot.slane %v50, %v54
    %vm57 = vcmask 261120
    %v59 = vsel %vm57, %v45, 0
    %61 = vmatprep.subr.mxu0 0.0
    %62 = vmatpush1.msra.mxu0 %v46
    %63 = vmatprep.subr.mxu0 0.0
    %64 = vmatpush1.msra.mxu0 %v47
    %65 = vmatprep.subr.mxu0 0.0
    %66 = vmatpush1.msra.mxu0 %v48
    %67 = vmatprep.subr.mxu0 0.0
    %68 = vmatpush1.msra.mxu0 %v49
    %69 = vmatprep.subr.mxu0 0.0
    %70 = vmatpush1.msra.mxu0 0.0
    %71 = vmatprep.subr.mxu0 0.0
    %72 = vmatpush1.msra.mxu0 0.0
    %73 = vmatprep.subr.mxu0 0.0
    %74 = vmatpush1.msra.mxu0 0.0
    %75 = vmatprep.subr.mxu0 0.0
    %76 = vmatpush1.msra.mxu0 0.0
    %77 = vmatprep.subr.mxu0 0.0
    %78 = vmatpush1.msra.mxu0 0.0
    %79 = vmatprep.subr.mxu0 0.0
    %80 = vmatpush1.msra.mxu0 0.0
    %81 = vmatprep.subr.mxu0 0.0
    %82 = vmatpush1.msra.mxu0 0.0
    %83 = vmatprep.subr.mxu0 0.0
    %84 = vmatpush1.msra.mxu0 0.0
    %85 = vmatprep.subr.mxu0 0.0
    %86 = vmatpush1.msra.mxu0 0.0
    %87 = vmatprep.subr.mxu0 0.0
    %88 = vmatpush1.msra.mxu0 0.0
    %89 = vmatprep.subr.mxu0 0.0
    %90 = vmatpush1.msra.mxu0 0.0
    %91 = vmatprep.subr.mxu0 0.0
    %92 = vmatpush1.msra.mxu0 0.0
    %93 = vmatprep.subr.mxu0 0.0
    %94 = vmatpush1.msra.mxu0 0.0
    %95 = vmatprep.subr.mxu0 0.0
    %96 = vmatpush1.msra.mxu0 0.0
    %97 = vmatprep.subr.mxu0 0.0
    %98 = vmatpush1.msra.mxu0 0.0
    %99 = vmatprep.subr.mxu0 0.0
    %100 = vmatpush1.msra.mxu0 0.0
    %101 = vmatprep.subr.mxu0 0.0
    %102 = vmatpush1.msra.mxu0 0.0
    %103 = vmatprep.subr.mxu0 0.0
    %104 = vmatpush1.msra.mxu0 0.0
    %105 = vmatprep.subr.mxu0 0.0
    %106 = vmatpush1.msra.mxu0 0.0
    %107 = vmatprep.subr.mxu0 0.0
    %108 = vmatpush1.msra.mxu0 0.0
    %109 = vmatprep.subr.mxu0 0.0
    %110 = vmatpush1.msra.mxu0 0.0
    %111 = vmatprep.subr.mxu0 0.0
    %112 = vmatpush1.msra.mxu0 0.0
    %113 = vmatprep.subr.mxu0 0.0
    %114 = vmatpush1.msra.mxu0 0.0
    %115 = vmatprep.subr.mxu0 0.0
    %116 = vmatpush1.msra.mxu0 0.0
    %117 = vmatprep.subr.mxu0 0.0
    %118 = vmatpush1.msra.mxu0 0.0
    %119 = vmatprep.subr.mxu0 0.0
    %120 = vmatpush1.msra.mxu0 0.0
    %121 = vmatprep.subr.mxu0 0.0
    %122 = vmatpush1.msra.mxu0 0.0
    %123 = vmatprep.subr.mxu0 0.0
    %124 = vmatpush1.msra.mxu0 0.0
    %125 = vmatprep.mubr.f32.mxu0 0.0
    %126 = vmatmul.mubr.f32.gmra.mrb[0].mxu0 %v59
    %v127 = vpop.f32.mrb[0].mxu0
    %v128 = vadd.f32 %v55, %v127
    %v129 = vpop.f32.mrb[0].mxu0
    %130 = vdwg.mxu0
    %131 = vmax.xlane.f32.xlu0 %v128
    %v132 = vpop.xlane.xlu0 %131
    %v133 = vsub.f32 %v128, %v132
    %v134 = vmul.f32 %v133, 1.442695
    %v135 = vpow.pop %v134
    %136 = vadd.xlane.f32.xlu0 %v135
    %v137 = vpop.xlane.xlu0 %136
    %v138 = vrcp.pop %v137
    %v139 = vmul.f32 %v135, %v138
    %140 = vst [vmem:[#allocation10] sm:$0xff] %v139
    %v141 = vlaneseq
    %v142 = vand.u32 %v141, 127
    %143 = vmax.xlane.f32.xlu0 %v139
    %v144 = vpop.xlane.xlu0 %143
    %vm145 = vcmp.ge.f32.partialorder %v139, %v144
    %v146 = vsel %vm145, %v142, 128
    %v147 = vand.u32 %v146, 65535
    %v148 = vshra.s32 %v146, 16
    %v149 = vcvt.s32.f32 %v147
    %v150 = vcvt.s32.f32 %v148
    %151 = vmin.xlane.f32.xlu0 %v150
    %v152 = vpop.xlane.xlu0 %151
    %vm153 = vcmp.eq.f32.partialorder %v150, %v152
    %v154 = vsel %vm153, %v149, inf
    %155 = vmin.xlane.f32.xlu0 %v154
    %v156 = vpop.xlane.xlu0 %155
    %v157 = vcvt.f32.s32 %v156
    %v158 = vcvt.f32.s32 %v152
    %v159 = vshll.u32 %v158, 16
    %v160 = vadd.s32 %v159, %v157
    %vm161 = vcmp.eq.s32.totalorder %v142, 0
    %v162 = vsel %vm161, %v144, 0.0
    %v163 = vsel %vm161, %v160, 0
    %vm164 = vcmp.eq.s32.totalorder %v142, %v160
    %v165 = vsel %vm164, -inf, %v139
    %166 = vmax.xlane.f32.xlu0 %v165
    %v167 = vpop.xlane.xlu0 %166
    %vm168 = vcmp.ge.f32.partialorder %v165, %v167
    %v169 = vsel %vm168, %v142, 128
    %v170 = vand.u32 %v169, 65535
    %v171 = vshra.s32 %v169, 16
    %v172 = vcvt.s32.f32 %v170
    %v173 = vcvt.s32.f32 %v171
    %174 = vmin.xlane.f32.xlu0 %v173
    %v175 = vpop.xlane.xlu0 %174
    %vm176 = vcmp.eq.f32.partialorder %v173, %v175
    %v177 = vsel %vm176, %v172, inf
    %178 = vmin.xlane.f32.xlu0 %v177
    %v179 = vpop.xlane.xlu0 %178
    %v180 = vcvt.f32.s32 %v179
    %v181 = vcvt.f32.s32 %v175
    %v182 = vshll.u32 %v181, 16
    %v183 = vadd.s32 %v182, %v180
    %vm184 = vcmp.eq.s32.totalorder %v142, 1
    %v185 = vsel %vm184, %v167, %v162
    %v186 = vsel %vm184, %v183, %v163
    %187 = vst [vmem:[#allocation7] sm:$0xff] %v185
    %188 = vst [vmem:[#allocation8] sm:$0xff] %v186
    // Predicated region
    $region22: #{tpu_custom_call.1} parent=1 // pred_check
      _
    $region23: #{tpu_custom_call.1} parent=1 // pred_check_branch
      %190 = sbr.rel (0) target = $region25
    $region24: #{tpu_custom_call.1} parent=1 // pred_region
      %s192 = ssub.s32 128, 128
      %193 = vsyncadd [#allocation4], %s192
      %s195 = sshll.u32 [#allocation7], 4
      %s196 = int_to_ptr.vmem [resolvable:$true] %s195
      %198 = dma.vmem_to_hbm [thread:$0]  %s196, 128, %s3, [#allocation4]
    $region25: #{tpu_custom_call.1} parent=1 // pred_fallthru
      _
    // Predicated region
    $region26: #{tpu_custom_call.1} parent=1 // pred_check
      _
    $region27: #{tpu_custom_call.1} parent=1 // pred_check_branch
      %200 = sbr.rel (0) target = $region29
    $region28: #{tpu_custom_call.1} parent=1 // pred_region
      %s202 = ssub.s32 128, 128
      %203 = vsyncadd [#allocation9], %s202
      %s205 = sshll.u32 [#allocation8], 4
      %s206 = int_to_ptr.vmem [resolvable:$true] %s205
      %208 = dma.vmem_to_hbm [thread:$0]  %s206, 128, %s4, [#allocation9]
    $region29: #{tpu_custom_call.1} parent=1 // pred_fallthru
      _
    // Predicated region
    $region30: #{tpu_custom_call.1} parent=1 // pred_check
      _
    $region31: #{tpu_custom_call.1} parent=1 // pred_check_branch
      %210 = sbr.rel (0) target = $region33
    $region32: #{tpu_custom_call.1} parent=1 // pred_region
      %s212 = ssub.s32 128, 128
      %213 = vsyncadd [#allocation9], %s212
      %s215 = sshll.u32 [#allocation10], 4
      %s216 = int_to_ptr.vmem [resolvable:$true] %s215
      %218 = dma.vmem_to_hbm [thread:$0]  %s216, 128, %s5, [#allocation9]
    $region33: #{tpu_custom_call.1} parent=1 // pred_fallthru
      _
    // Predicated region
    $region34: #{tpu_custom_call.1} parent=1 // pred_check
      _
    $region35: #{tpu_custom_call.1} parent=1 // pred_check_branch
      %220 = sbr.rel (0) target = $region37
    $region36: #{tpu_custom_call.1} parent=1 // pred_region
      %221 = dma.done [#allocation4], 128
    $region37: #{tpu_custom_call.1} parent=1 // pred_fallthru
      _
    // Predicated region
    $region38: #{tpu_custom_call.1} parent=1 // pred_check
      _
    $region39: #{tpu_custom_call.1} parent=1 // pred_check_branch
      %223 = sbr.rel (0) target = $region41
    $region40: #{tpu_custom_call.1} parent=1 // pred_region
      %224 = dma.done [#allocation9], 128
    $region41: #{tpu_custom_call.1} parent=1 // pred_fallthru
      _
    // Predicated region
    $region42: #{tpu_custom_call.1} parent=1 // pred_check
      _
    $region43: #{tpu_custom_call.1} parent=1 // pred_check_branch
      %226 = sbr.rel (0) target = $region45
    $region44: #{tpu_custom_call.1} parent=1 // pred_region
      %227 = dma.done [#allocation9], 128
    $region45: #{tpu_custom_call.1} parent=1 // pred_fallthru
      _
    %228 = vsyncpa [#allocation3], 1
    %229 = vsyncpa [#allocation6], 1
    %230 = vsyncpa [#allocation4], 1
    %231 = vsyncpa [#allocation9], 1

</llo_original>
